<compile_context>
chip_gen: v5e
topology: v5e:2x2
jax: 0.10.0
libtpu: 0.0.40
codegen_flags: <defaults>
</compile_context>

<pallas_src>
import functools

import jax
import jax.numpy as jnp
from jax.experimental import pallas as pl
from jax.experimental.pallas import tpu as pltpu


def _round_up(n: int, m: int) -> int:
    return ((n + m - 1) // m) * m


def _tpu_config():
    """Returns (vmem_limit_bytes, batch_tile_target, batch_dim_semantics) for this TPU."""
    mib = 1024 * 1024
    vmem_cap = 128 * mib
    try:
        vmem_cap = int(pltpu.get_tpu_info().vmem_capacity_bytes)
    except Exception:
        pass
    try:
        kind = jax.devices()[0].device_kind.lower()
    except Exception:
        kind = ""
    if "v7" in kind:                     # v7x: 64 MiB VMEM per TensorCore
        vmem_cap = min(vmem_cap, 64 * mib)
    vmem_limit = (vmem_cap * 3) // 4     # ~96 MiB on v5e/v6e, ~48 MiB on v7x
    tb_target = 512 if vmem_cap >= 96 * mib else 256
    # Only CORE_PARALLEL actually splits the grid across v7x's two TensorCores.
    batch_sem = pltpu.CORE_PARALLEL if "v7" in kind else "parallel"
    return vmem_limit, tb_target, batch_sem


def _pick_batch_tile(B: int, target: int) -> int:
    """Batch tile: full-dim block for small B, otherwise a 128-multiple minimizing padding."""
    if B <= target:
        return B                                   # single full-dim block (exempt from (8,128))
    best_tb, best_pad = target, (-B) % target
    tb = target - 128
    while tb >= 128:
        pad = (-B) % tb
        if pad < best_pad:
            best_tb, best_pad = tb, pad
        tb -= 128
    return best_tb


def _mlp_kernel(num_hidden, stream, *refs):
    """Fused MLP over one batch tile. bf16 MXU operands, f32 accumulation."""
    bf16 = jnp.bfloat16
    if stream:
        (x_ref, w_in_ref, b_in_ref, w_hid_hbm, b_hid_ref,
         w_out_ref, b_out_ref, o_ref, wbuf, sem) = refs
        # Prefetch hidden layer 0 while the input layer runs on the MXU.
        pltpu.make_async_copy(w_hid_hbm.at[0], wbuf.at[0], sem.at[0]).start()
    elif num_hidden > 0:
        (x_ref, w_in_ref, b_in_ref, w_hid_ref, b_hid_ref,
         w_out_ref, b_out_ref, o_ref) = refs
    else:
        (x_ref, w_in_ref, b_in_ref, w_out_ref, b_out_ref, o_ref) = refs

    # Input layer: Linear + ReLU (x cast to bf16 in-register; no padded HBM copy of x).
    h = jnp.dot(x_ref[...].astype(bf16), w_in_ref[...],
                preferred_element_type=jnp.float32) + b_in_ref[...]
    h = jnp.maximum(h, 0.0)

    # Hidden layers: Linear + ReLU (+ Dropout = identity in eval mode).
    for l in range(num_hidden):
        if stream:
            slot = l & 1
            pltpu.make_async_copy(w_hid_hbm.at[l], wbuf.at[slot], sem.at[slot]).wait()
            if l + 1 < num_hidden:       # prefetch next layer's weights behind this matmul
                pltpu.make_async_copy(w_hid_hbm.at[l + 1], wbuf.at[1 - slot],
                                      sem.at[1 - slot]).start()
            w_l = wbuf[slot]
        else:
            w_l = w_hid_ref[l]
        h = jnp.dot(h.astype(bf16), w_l,
                    preferred_element_type=jnp.float32) + b_hid_ref[l]
        h = jnp.maximum(h, 0.0)

    # Output layer: Linear, no activation.
    o_ref[...] = (jnp.dot(h.astype(bf16), w_out_ref[...],
                          preferred_element_type=jnp.float32)
                  + b_out_ref[...]).astype(o_ref.dtype)


def prepare_params(w_in, b_in, w_hid, b_hid, w_out, b_out):
    """One-time parameter prep (hoisted out of the per-call forward):
    matmul operands cast to bf16; biases kept f32 in broadcastable (1, H) layout."""
    bf16 = jnp.bfloat16
    L, H = w_hid.shape[0], w_in.shape[1]
    return (
        jnp.asarray(w_in, bf16),
        jnp.asarray(b_in, jnp.float32).reshape(1, -1),
        jnp.asarray(w_hid, bf16).reshape(L, H, H),
        jnp.asarray(b_hid, jnp.float32).reshape(L, 1, H),
        jnp.asarray(w_out, bf16),
        jnp.asarray(b_out, jnp.float32).reshape(1, -1),
    )


@functools.partial(jax.jit,
                   static_argnames=("block_b", "stream_hidden", "weight_buffers"))
def fcn_forward(x, w_in, b_in, w_hid, b_hid, w_out, b_out, *,
                block_b=None, stream_hidden=None, weight_buffers=1):
    """Fused MLP forward. Expects bf16 weights / f32 (1, .) biases from prepare_params().

    x: (B, ...) any trailing shape, flattened row-major like nn.Flatten.
    Returns (B, output_size) float32.
    """
    B = x.shape[0]
    x = x.reshape(B, -1)                          # nn.Flatten (metadata-only)
    K = x.shape[1]
    H = w_in.shape[1]
    O = w_out.shape[1]
    L = w_hid.shape[0]

    vmem_limit, tb_target, batch_sem = _tpu_config()
    TB = _pick_batch_tile(B, block_b if block_b is not None else tb_target)
    Bp = _round_up(B, TB)
    if Bp != B:                                   # pad batch only when B % TB != 0
        x = jnp.zeros((Bp, K), x.dtype).at[:B].set(x)

    # Stream hidden weights layer-by-layer when the resident stack would not fit VMEM
    # comfortably (e.g. v7x with deep/wide hidden layers).
    if stream_hidden is None:
        stream_hidden = (L > 0) and (L * H * H * 2 > vmem_limit // 2)
    stream_hidden = bool(stream_hidden) and L > 0

    def const_spec(shape):
        idx = lambda i, _n=len(shape): (0,) * _n
        if weight_buffers == 1:
            try:   # constant index map -> fetched once; avoid doubling VMEM footprint
                return pl.BlockSpec(shape, idx, pipeline_mode=pl.Buffered(1))
            except (TypeError, AttributeError):
                pass
        return pl.BlockSpec(shape, idx)

    in_specs = [pl.BlockSpec((TB, K), lambda i: (i, 0)),   # x: batch-tiled, pipelined
                const_spec((K, H)), const_spec((1, H))]
    operands = [x, w_in, b_in]
    scratch_shapes = []
    if L > 0:
        if stream_hidden:
            in_specs.append(pl.BlockSpec(memory_space=pl.ANY))      # w_hid stays in HBM
            scratch_shapes = [pltpu.VMEM((2, H, H), jnp.bfloat16),  # 2-slot layer buffer
                              pltpu.SemaphoreType.DMA((2,))]
        else:
            in_specs.append(const_spec((L, H, H)))                  # resident hidden weights
        in_specs.append(const_spec((L, 1, H)))
        operands += [w_hid, b_hid]
    in_specs += [const_spec((H, O)), const_spec((1, O))]
    operands += [w_out, b_out]

    out = pl.pallas_call(
        functools.partial(_mlp_kernel, L, stream_hidden),
        out_shape=jax.ShapeDtypeStruct((Bp, O), jnp.float32),
        grid=(Bp // TB,),
        in_specs=in_specs,
        out_specs=pl.BlockSpec((TB, O), lambda i: (i, 0)),
        scratch_shapes=scratch_shapes,
        compiler_params=pltpu.CompilerParams(
            dimension_semantics=(batch_sem,),
            vmem_limit_bytes=int(vmem_limit)),
    )(*operands)

    return out[:B] if Bp != B else out


def _torch_linear_init(key, fan_in, fan_out):
    """Deterministic init mimicking torch.nn.Linear default (uniform +-1/sqrt(fan_in))."""
    kw, kb = jax.random.split(key)
    bound = 1.0 / jnp.sqrt(jnp.float32(fan_in))
    w = jax.random.uniform(kw, (fan_in, fan_out), jnp.float32, -bound, bound)
    b = jax.random.uniform(kb, (1, fan_out), jnp.float32, -bound, bound)
    return w, b


def reference_forward(x, w_in, b_in, w_hid, b_hid, w_out, b_out):
    """Pure-JAX reference with the same bf16-operand / f32-accumulate numerics."""
    bf16 = jnp.bfloat16
    h = jnp.dot(x.astype(bf16), w_in.astype(bf16),
                preferred_element_type=jnp.float32) + b_in
    h = jnp.maximum(h, 0.0)
    for l in range(w_hid.shape[0]):
        h = jnp.dot(h.astype(bf16), w_hid[l].astype(bf16),
                    preferred_element_type=jnp.float32) + b_hid[l]
        h = jnp.maximum(h, 0.0)
    return jnp.dot(h.astype(bf16), w_out.astype(bf16),
                   preferred_element_type=jnp.float32) + b_out


if __name__ == "__main__":
    # Module hyperparameters (small, consistent with the forward semantics).
    batch = 2
    channels = 4
    seq = 16
    input_size = channels * seq          # flattened feature size = 64
    hidden_size = 32
    output_size = 8
    num_fcn_layers = 3                   # -> 2 hidden Linear layers after the input layer
    # dropout = 0.1                      # identity in eval mode

    key = jax.random.PRNGKey(0)
    k_x, k_in, k_h, k_out = jax.random.split(key, 4)

    # Example input in torch layout (B, C, S); nn.Flatten -> (B, C*S) row-major.
    x = jax.random.normal(k_x, (batch, channels, seq), jnp.float32)

    # Parameters, deterministically initialized.
    w_in, b_in = _torch_linear_init(k_in, input_size, hidden_size)
    num_hidden = num_fcn_layers - 1
    if num_hidden > 0:
        hkeys = jax.random.split(k_h, num_hidden)
        ws, bs = zip(*[_torch_linear_init(hk, hidden_size, hidden_size) for hk in hkeys])
        w_hid, b_hid = jnp.stack(ws), jnp.stack(bs)          # (L-1, H, H), (L-1, 1, H)
    else:
        w_hid = jnp.zeros((0, hidden_size, hidden_size), jnp.float32)
        b_hid = jnp.zeros((0, 1, hidden_size), jnp.float32)
    w_out, b_out = _torch_linear_init(k_out, hidden_size, output_size)

    # One-time prep (bf16 cast) -- hoisted out of the per-call forward.
    params = prepare_params(w_in, b_in, w_hid, b_hid, w_out, b_out)

    # Resident-weight path (default). Fall back to double-buffered weights if the
    # installed jax does not accept single-buffered (Buffered(1)) resident operands.
    try:
        out = jax.block_until_ready(fcn_forward(x, *params))
    except Exception:
        out = jax.block_until_ready(fcn_forward(x, *params, weight_buffers=2))

    ref = reference_forward(x.reshape(batch, -1), w_in, b_in, w_hid, b_hid, w_out, b_out)
    assert out.shape == (batch, output_size)
    assert jnp.allclose(out, ref, atol=2e-3, rtol=2e-3), (
        f"max abs err = {jnp.max(jnp.abs(out - ref))}")

    # Also exercise the streamed hidden-weight path (v7x / large-model configuration).
    try:
        out_s = jax.block_until_ready(fcn_forward(x, *params, stream_hidden=True))
    except Exception:
        out_s = jax.block_until_ready(
            fcn_forward(x, *params, stream_hidden=True, weight_buffers=2))
    assert jnp.allclose(out_s, ref, atol=2e-3, rtol=2e-3), (
        f"streamed path max abs err = {jnp.max(jnp.abs(out_s - ref))}")

    print("KERNEL_OK")
</pallas_src>

<mosaic_0001>
module attributes {stable_mosaic.version = 11 : i64} {
  func.func @_mlp_kernel(%arg0: i32, %arg1: memref<2x64xf32, #tpu.memory_space<vmem>>, %arg2: memref<64x32xbf16, #tpu.memory_space<vmem>>, %arg3: memref<1x32xf32, #tpu.memory_space<vmem>>, %arg4: memref<2x32x32xbf16, #tpu.memory_space<vmem>>, %arg5: memref<2x1x32xf32, #tpu.memory_space<vmem>>, %arg6: memref<32x8xbf16, #tpu.memory_space<vmem>>, %arg7: memref<1x8xf32, #tpu.memory_space<vmem>>, %arg8: memref<2x8xf32, #tpu.memory_space<vmem>>) attributes {dimension_semantics = [#tpu.dimension_semantics<parallel>], iteration_bounds = array<i64: 1>, scalar_prefetch = 0 : i64, scratch_operands = 0 : i64, tpu.core_type = #tpu.core_type<tc>, window_params = [{transform_indices = @transform_0, window_bounds = array<i64: 2, 64>}, {pipeline_mode = #tpu.pipeline_mode<synchronous>, transform_indices = @transform_1, window_bounds = array<i64: 64, 32>}, {pipeline_mode = #tpu.pipeline_mode<synchronous>, transform_indices = @transform_2, window_bounds = array<i64: 1, 32>}, {pipeline_mode = #tpu.pipeline_mode<synchronous>, transform_indices = @transform_3, window_bounds = array<i64: 2, 32, 32>}, {pipeline_mode = #tpu.pipeline_mode<synchronous>, transform_indices = @transform_4, window_bounds = array<i64: 2, 1, 32>}, {pipeline_mode = #tpu.pipeline_mode<synchronous>, transform_indices = @transform_5, window_bounds = array<i64: 32, 8>}, {pipeline_mode = #tpu.pipeline_mode<synchronous>, transform_indices = @transform_6, window_bounds = array<i64: 1, 8>}, {transform_indices = @transform_7, window_bounds = array<i64: 2, 8>}]} {
    %c0 = arith.constant 0 : index
    %c0_0 = arith.constant 0 : index
    %0 = vector.load %arg1[%c0, %c0_0] : memref<2x64xf32, #tpu.memory_space<vmem>>, vector<2x64xf32>
    %1 = arith.truncf %0 : vector<2x64xf32> to vector<2x64xbf16>
    %c0_1 = arith.constant 0 : index
    %c0_2 = arith.constant 0 : index
    %2 = vector.load %arg2[%c0_1, %c0_2] : memref<64x32xbf16, #tpu.memory_space<vmem>>, vector<64x32xbf16>
    %cst = arith.constant dense<0.000000e+00> : vector<2x32xf32>
    %3 = tpu.matmul %1, %2, %cst {dimension_numbers = #tpu.dot_dimension_numbers<[1], [0], [0], [1], [0, 0, 1, 1], [], []>} : vector<2x64xbf16>, vector<64x32xbf16>, vector<2x32xf32> -> vector<2x32xf32>
    %c0_3 = arith.constant 0 : index
    %c0_4 = arith.constant 0 : index
    %4 = vector.load %arg3[%c0_3, %c0_4] : memref<1x32xf32, #tpu.memory_space<vmem>>, vector<1x32xf32>
    %5 = vector.broadcast %4 : vector<1x32xf32> to vector<2x32xf32>
    %6 = arith.addf %3, %5 : vector<2x32xf32>
    %cst_5 = arith.constant 0.000000e+00 : f32
    %7 = vector.broadcast %cst_5 : f32 to vector<2x32xf32>
    %8 = arith.maximumf %6, %7 : vector<2x32xf32>
    %c0_6 = arith.constant 0 : index
    %c0_7 = arith.constant 0 : index
    %c0_8 = arith.constant 0 : index
    %9 = vector.load %arg4[%c0_6, %c0_7, %c0_8] : memref<2x32x32xbf16, #tpu.memory_space<vmem>>, vector<1x32x32xbf16>
    %10 = vector.shape_cast %9 : vector<1x32x32xbf16> to vector<32x32xbf16>
    %11 = arith.truncf %8 : vector<2x32xf32> to vector<2x32xbf16>
    %cst_9 = arith.constant dense<0.000000e+00> : vector<2x32xf32>
    %12 = tpu.matmul %11, %10, %cst_9 {dimension_numbers = #tpu.dot_dimension_numbers<[1], [0], [0], [1], [0, 0, 1, 1], [], []>} : vector<2x32xbf16>, vector<32x32xbf16>, vector<2x32xf32> -> vector<2x32xf32>
    %c0_10 = arith.constant 0 : index
    %c0_11 = arith.constant 0 : index
    %c0_12 = arith.constant 0 : index
    %13 = vector.load %arg5[%c0_10, %c0_11, %c0_12] : memref<2x1x32xf32, #tpu.memory_space<vmem>>, vector<1x1x32xf32>
    %14 = vector.shape_cast %13 : vector<1x1x32xf32> to vector<1x32xf32>
    %15 = vector.broadcast %14 : vector<1x32xf32> to vector<2x32xf32>
    %16 = arith.addf %12, %15 : vector<2x32xf32>
    %cst_13 = arith.constant 0.000000e+00 : f32
    %17 = vector.broadcast %cst_13 : f32 to vector<2x32xf32>
    %18 = arith.maximumf %16, %17 : vector<2x32xf32>
    %c1 = arith.constant 1 : index
    %c0_14 = arith.constant 0 : index
    %c0_15 = arith.constant 0 : index
    %19 = vector.load %arg4[%c1, %c0_14, %c0_15] : memref<2x32x32xbf16, #tpu.memory_space<vmem>>, vector<1x32x32xbf16>
    %20 = vector.shape_cast %19 : vector<1x32x32xbf16> to vector<32x32xbf16>
    %21 = arith.truncf %18 : vector<2x32xf32> to vector<2x32xbf16>
    %cst_16 = arith.constant dense<0.000000e+00> : vector<2x32xf32>
    %22 = tpu.matmul %21, %20, %cst_16 {dimension_numbers = #tpu.dot_dimension_numbers<[1], [0], [0], [1], [0, 0, 1, 1], [], []>} : vector<2x32xbf16>, vector<32x32xbf16>, vector<2x32xf32> -> vector<2x32xf32>
    %c1_17 = arith.constant 1 : index
    %c0_18 = arith.constant 0 : index
    %c0_19 = arith.constant 0 : index
    %23 = vector.load %arg5[%c1_17, %c0_18, %c0_19] : memref<2x1x32xf32, #tpu.memory_space<vmem>>, vector<1x1x32xf32>
    %24 = vector.shape_cast %23 : vector<1x1x32xf32> to vector<1x32xf32>
    %25 = vector.broadcast %24 : vector<1x32xf32> to vector<2x32xf32>
    %26 = arith.addf %22, %25 : vector<2x32xf32>
    %cst_20 = arith.constant 0.000000e+00 : f32
    %27 = vector.broadcast %cst_20 : f32 to vector<2x32xf32>
    %28 = arith.maximumf %26, %27 : vector<2x32xf32>
    %29 = arith.truncf %28 : vector<2x32xf32> to vector<2x32xbf16>
    %c0_21 = arith.constant 0 : index
    %c0_22 = arith.constant 0 : index
    %30 = vector.load %arg6[%c0_21, %c0_22] : memref<32x8xbf16, #tpu.memory_space<vmem>>, vector<32x8xbf16>
    %cst_23 = arith.constant dense<0.000000e+00> : vector<2x8xf32>
    %31 = tpu.matmul %29, %30, %cst_23 {dimension_numbers = #tpu.dot_dimension_numbers<[1], [0], [0], [1], [0, 0, 1, 1], [], []>} : vector<2x32xbf16>, vector<32x8xbf16>, vector<2x8xf32> -> vector<2x8xf32>
    %c0_24 = arith.constant 0 : index
    %c0_25 = arith.constant 0 : index
    %32 = vector.load %arg7[%c0_24, %c0_25] : memref<1x8xf32, #tpu.memory_space<vmem>>, vector<1x8xf32>
    %33 = vector.broadcast %32 : vector<1x8xf32> to vector<2x8xf32>
    %34 = arith.addf %31, %33 : vector<2x8xf32>
    %c0_26 = arith.constant 0 : index
    %c0_27 = arith.constant 0 : index
    %35 = vector.load %arg8[%c0_26, %c0_27] : memref<2x8xf32, #tpu.memory_space<vmem>>, vector<2x8xf32>
    tpu.vector_store %arg8[%c0_26, %c0_27], %34 {strides = array<i32>} : memref<2x8xf32, #tpu.memory_space<vmem>>, vector<2x8xf32>,
    return
  }
  func.func @transform_0(%arg0: i32) -> (i32, i32) {
    %c0_i32 = arith.constant 0 : i32
    %c0_i32_0 = arith.constant 0 : i32
    return %arg0, %c0_i32 : i32, i32
  }
  func.func @transform_1(%arg0: i32) -> (i32, i32) {
    %c0_i32 = arith.constant 0 : i32
    %c0_i32_0 = arith.constant 0 : i32
    %c0_i32_1 = arith.constant 0 : i32
    return %c0_i32, %c0_i32_0 : i32, i32
  }
  func.func @transform_2(%arg0: i32) -> (i32, i32) {
    %c0_i32 = arith.constant 0 : i32
    %c0_i32_0 = arith.constant 0 : i32
    %c0_i32_1 = arith.constant 0 : i32
    return %c0_i32, %c0_i32_0 : i32, i32
  }
  func.func @transform_3(%arg0: i32) -> (i32, i32, i32) {
    %c0_i32 = arith.constant 0 : i32
    %c0_i32_0 = arith.constant 0 : i32
    %c0_i32_1 = arith.constant 0 : i32
    %c0_i32_2 = arith.constant 0 : i32
    return %c0_i32, %c0_i32_0, %c0_i32_1 : i32, i32, i32
  }
  func.func @transform_4(%arg0: i32) -> (i32, i32, i32) {
    %c0_i32 = arith.constant 0 : i32
    %c0_i32_0 = arith.constant 0 : i32
    %c0_i32_1 = arith.constant 0 : i32
    %c0_i32_2 = arith.constant 0 : i32
    return %c0_i32, %c0_i32_0, %c0_i32_1 : i32, i32, i32
  }
  func.func @transform_5(%arg0: i32) -> (i32, i32) {
    %c0_i32 = arith.constant 0 : i32
    %c0_i32_0 = arith.constant 0 : i32
    %c0_i32_1 = arith.constant 0 : i32
    return %c0_i32, %c0_i32_0 : i32, i32
  }
  func.func @transform_6(%arg0: i32) -> (i32, i32) {
    %c0_i32 = arith.constant 0 : i32
    %c0_i32_0 = arith.constant 0 : i32
    %c0_i32_1 = arith.constant 0 : i32
    return %c0_i32, %c0_i32_0 : i32, i32
  }
  func.func @transform_7(%arg0: i32) -> (i32, i32) {
    %c0_i32 = arith.constant 0 : i32
    %c0_i32_0 = arith.constant 0 : i32
    return %arg0, %c0_i32 : i32, i32
  }
}

module attributes {stable_mosaic.version = 11 : i64} {
  func.func @_mlp_kernel(%arg0: i32, %arg1: memref<2x64xf32, #tpu.memory_space<vmem>>, %arg2: memref<64x32xbf16, #tpu.memory_space<vmem>>, %arg3: memref<1x32xf32, #tpu.memory_space<vmem>>, %arg4: memref<2x32x32xbf16, #tpu.memory_space<vmem>>, %arg5: memref<2x1x32xf32, #tpu.memory_space<vmem>>, %arg6: memref<32x8xbf16, #tpu.memory_space<vmem>>, %arg7: memref<1x8xf32, #tpu.memory_space<vmem>>, %arg8: memref<2x8xf32, #tpu.memory_space<vmem>>) attributes {dimension_semantics = [#tpu.dimension_semantics<parallel>], iteration_bounds = array<i64: 1>, scalar_prefetch = 0 : i64, scratch_operands = 0 : i64, tpu.core_type = #tpu.core_type<tc>, window_params = [{transform_indices = @transform_0, window_bounds = array<i64: 2, 64>}, {pipeline_mode = #tpu.pipeline_mode<synchronous>, transform_indices = @transform_1, window_bounds = array<i64: 64, 32>}, {pipeline_mode = #tpu.pipeline_mode<synchronous>, transform_indices = @transform_2, window_bounds = array<i64: 1, 32>}, {pipeline_mode = #tpu.pipeline_mode<synchronous>, transform_indices = @transform_3, window_bounds = array<i64: 2, 32, 32>}, {pipeline_mode = #tpu.pipeline_mode<synchronous>, transform_indices = @transform_4, window_bounds = array<i64: 2, 1, 32>}, {pipeline_mode = #tpu.pipeline_mode<synchronous>, transform_indices = @transform_5, window_bounds = array<i64: 32, 8>}, {pipeline_mode = #tpu.pipeline_mode<synchronous>, transform_indices = @transform_6, window_bounds = array<i64: 1, 8>}, {transform_indices = @transform_7, window_bounds = array<i64: 2, 8>}]} {
    %c0 = arith.constant 0 : index
    %c0_0 = arith.constant 0 : index
    %0 = vector.load %arg1[%c0, %c0_0] : memref<2x64xf32, #tpu.memory_space<vmem>>, vector<2x64xf32>
    %1 = arith.truncf %0 : vector<2x64xf32> to vector<2x64xbf16>
    %c0_1 = arith.constant 0 : index
    %c0_2 = arith.constant 0 : index
    %2 = vector.load %arg2[%c0_1, %c0_2] : memref<64x32xbf16, #tpu.memory_space<vmem>>, vector<64x32xbf16>
    %cst = arith.constant dense<0.000000e+00> : vector<2x32xf32>
    %3 = tpu.matmul %1, %2, %cst {dimension_numbers = #tpu.dot_dimension_numbers<[1], [0], [0], [1], [0, 0, 1, 1], [], []>} : vector<2x64xbf16>, vector<64x32xbf16>, vector<2x32xf32> -> vector<2x32xf32>
    %c0_3 = arith.constant 0 : index
    %c0_4 = arith.constant 0 : index
    %4 = vector.load %arg3[%c0_3, %c0_4] : memref<1x32xf32, #tpu.memory_space<vmem>>, vector<1x32xf32>
    %5 = vector.broadcast %4 : vector<1x32xf32> to vector<2x32xf32>
    %6 = arith.addf %3, %5 : vector<2x32xf32>
    %cst_5 = arith.constant 0.000000e+00 : f32
    %7 = vector.broadcast %cst_5 : f32 to vector<2x32xf32>
    %8 = arith.maximumf %6, %7 : vector<2x32xf32>
    %c0_6 = arith.constant 0 : index
    %c0_7 = arith.constant 0 : index
    %c0_8 = arith.constant 0 : index
    %9 = vector.load %arg4[%c0_6, %c0_7, %c0_8] : memref<2x32x32xbf16, #tpu.memory_space<vmem>>, vector<1x32x32xbf16>
    %10 = vector.shape_cast %9 : vector<1x32x32xbf16> to vector<32x32xbf16>
    %11 = arith.truncf %8 : vector<2x32xf32> to vector<2x32xbf16>
    %cst_9 = arith.constant dense<0.000000e+00> : vector<2x32xf32>
    %12 = tpu.matmul %11, %10, %cst_9 {dimension_numbers = #tpu.dot_dimension_numbers<[1], [0], [0], [1], [0, 0, 1, 1], [], []>} : vector<2x32xbf16>, vector<32x32xbf16>, vector<2x32xf32> -> vector<2x32xf32>
    %c0_10 = arith.constant 0 : index
    %c0_11 = arith.constant 0 : index
    %c0_12 = arith.constant 0 : index
    %13 = vector.load %arg5[%c0_10, %c0_11, %c0_12] : memref<2x1x32xf32, #tpu.memory_space<vmem>>, vector<1x1x32xf32>
    %14 = vector.shape_cast %13 : vector<1x1x32xf32> to vector<1x32xf32>
    %15 = vector.broadcast %14 : vector<1x32xf32> to vector<2x32xf32>
    %16 = arith.addf %12, %15 : vector<2x32xf32>
    %cst_13 = arith.constant 0.000000e+00 : f32
    %17 = vector.broadcast %cst_13 : f32 to vector<2x32xf32>
    %18 = arith.maximumf %16, %17 : vector<2x32xf32>
    %c1 = arith.constant 1 : index
    %c0_14 = arith.constant 0 : index
    %c0_15 = arith.constant 0 : index
    %19 = vector.load %arg4[%c1, %c0_14, %c0_15] : memref<2x32x32xbf16, #tpu.memory_space<vmem>>, vector<1x32x32xbf16>
    %20 = vector.shape_cast %19 : vector<1x32x32xbf16> to vector<32x32xbf16>
    %21 = arith.truncf %18 : vector<2x32xf32> to vector<2x32xbf16>
    %cst_16 = arith.constant dense<0.000000e+00> : vector<2x32xf32>
    %22 = tpu.matmul %21, %20, %cst_16 {dimension_numbers = #tpu.dot_dimension_numbers<[1], [0], [0], [1], [0, 0, 1, 1], [], []>} : vector<2x32xbf16>, vector<32x32xbf16>, vector<2x32xf32> -> vector<2x32xf32>
    %c1_17 = arith.constant 1 : index
    %c0_18 = arith.constant 0 : index
    %c0_19 = arith.constant 0 : index
    %23 = vector.load %arg5[%c1_17, %c0_18, %c0_19] : memref<2x1x32xf32, #tpu.memory_space<vmem>>, vector<1x1x32xf32>
    %24 = vector.shape_cast %23 : vector<1x1x32xf32> to vector<1x32xf32>
    %25 = vector.broadcast %24 : vector<1x32xf32> to vector<2x32xf32>
    %26 = arith.addf %22, %25 : vector<2x32xf32>
    %cst_20 = arith.constant 0.000000e+00 : f32
    %27 = vector.broadcast %cst_20 : f32 to vector<2x32xf32>
    %28 = arith.maximumf %26, %27 : vector<2x32xf32>
    %29 = arith.truncf %28 : vector<2x32xf32> to vector<2x32xbf16>
    %c0_21 = arith.constant 0 : index
    %c0_22 = arith.constant 0 : index
    %30 = vector.load %arg6[%c0_21, %c0_22] : memref<32x8xbf16, #tpu.memory_space<vmem>>, vector<32x8xbf16>
    %cst_23 = arith.constant dense<0.000000e+00> : vector<2x8xf32>
    %31 = tpu.matmul %29, %30, %cst_23 {dimension_numbers = #tpu.dot_dimension_numbers<[1], [0], [0], [1], [0, 0, 1, 1], [], []>} : vector<2x32xbf16>, vector<32x8xbf16>, vector<2x8xf32> -> vector<2x8xf32>
    %c0_24 = arith.constant 0 : index
    %c0_25 = arith.constant 0 : index
    %32 = vector.load %arg7[%c0_24, %c0_25] : memref<1x8xf32, #tpu.memory_space<vmem>>, vector<1x8xf32>
    %33 = vector.broadcast %32 : vector<1x8xf32> to vector<2x8xf32>
    %34 = arith.addf %31, %33 : vector<2x8xf32>
    %c0_26 = arith.constant 0 : index
    %c0_27 = arith.constant 0 : index
    %35 = vector.load %arg8[%c0_26, %c0_27] : memref<2x8xf32, #tpu.memory_space<vmem>>, vector<2x8xf32>
    tpu.vector_store %arg8[%c0_26, %c0_27], %34 {strides = array<i32>} : memref<2x8xf32, #tpu.memory_space<vmem>>, vector<2x8xf32>,
    return
  }
  func.func @transform_0(%arg0: i32) -> (i32, i32) {
    %c0_i32 = arith.constant 0 : i32
    %c0_i32_0 = arith.constant 0 : i32
    return %arg0, %c0_i32 : i32, i32
  }
  func.func @transform_1(%arg0: i32) -> (i32, i32) {
    %c0_i32 = arith.constant 0 : i32
    %c0_i32_0 = arith.constant 0 : i32
    %c0_i32_1 = arith.constant 0 : i32
    return %c0_i32, %c0_i32_0 : i32, i32
  }
  func.func @transform_2(%arg0: i32) -> (i32, i32) {
    %c0_i32 = arith.constant 0 : i32
    %c0_i32_0 = arith.constant 0 : i32
    %c0_i32_1 = arith.constant 0 : i32
    return %c0_i32, %c0_i32_0 : i32, i32
  }
  func.func @transform_3(%arg0: i32) -> (i32, i32, i32) {
    %c0_i32 = arith.constant 0 : i32
    %c0_i32_0 = arith.constant 0 : i32
    %c0_i32_1 = arith.constant 0 : i32
    %c0_i32_2 = arith.constant 0 : i32
    return %c0_i32, %c0_i32_0, %c0_i32_1 : i32, i32, i32
  }
  func.func @transform_4(%arg0: i32) -> (i32, i32, i32) {
    %c0_i32 = arith.constant 0 : i32
    %c0_i32_0 = arith.constant 0 : i32
    %c0_i32_1 = arith.constant 0 : i32
    %c0_i32_2 = arith.constant 0 : i32
    return %c0_i32, %c0_i32_0, %c0_i32_1 : i32, i32, i32
  }
  func.func @transform_5(%arg0: i32) -> (i32, i32) {
    %c0_i32 = arith.constant 0 : i32
    %c0_i32_0 = arith.constant 0 : i32
    %c0_i32_1 = arith.constant 0 : i32
    return %c0_i32, %c0_i32_0 : i32, i32
  }
  func.func @transform_6(%arg0: i32) -> (i32, i32) {
    %c0_i32 = arith.constant 0 : i32
    %c0_i32_0 = arith.constant 0 : i32
    %c0_i32_1 = arith.constant 0 : i32
    return %c0_i32, %c0_i32_0 : i32, i32
  }
  func.func @transform_7(%arg0: i32) -> (i32, i32) {
    %c0_i32 = arith.constant 0 : i32
    %c0_i32_0 = arith.constant 0 : i32
    return %arg0, %c0_i32 : i32, i32
  }
}

</mosaic_0001>

<llo_original>
// kernel: fcn_forward.1
$region0: #{fcn_forward.1}
  #allocation0 [shape = 'u32[]', space=smem, size = 0x4, offset = 0x4, fixed_abs, tag = 'smem constant byte address 0x4 - core index']
  #allocation1 [shape = 'u32[72,128]{1,0:T(1,128)}', space=vmem, size = 0x9000, scoped, tag = 'internal scratch']
  %s0 = inlined_call_operand.vmem [shape: f32[2,64], index: 0, kind: input, shape index: {}]
  %s1 = inlined_call_operand.vmem [shape: bf16[64,32], index: 1, kind: input, shape index: {}]
  %s2 = inlined_call_operand.vmem [shape: f32[1,32], index: 2, kind: input, shape index: {}]
  %s3 = inlined_call_operand.vmem [shape: bf16[2,32,32], index: 3, kind: input, shape index: {}]
  %s4 = inlined_call_operand.vmem [shape: f32[2,1,32], index: 4, kind: input, shape index: {}]
  %s5 = inlined_call_operand.vmem [shape: bf16[32,8], index: 5, kind: input, shape index: {}]
  %s6 = inlined_call_operand.vmem [shape: f32[1,8], index: 6, kind: input, shape index: {}]
  %s7 = inlined_call_operand.hbm [shape: f32[2,8], index: 7, kind: output, shape index: {}]
  %s8 = sld [smem:[#allocation0]]
  $region38: #{fcn_forward.1} parent=0
    _
  %s10 = ssub.s32 1, %s8
  %s11 = scalar_select 0, %s10, %s8
  $region1: #{fcn_forward.1} parent=0
    #allocation2 [shape = 'u8[1024]{0}', space=vmem, size = 0x400, scoped, tag = 'output window, operand 0, single buffered']
    #allocation3 [shape = 's32[1]{0}', space=sflag, size = 0x4, scoped, tag = 'scoped memory for fcn_forward.1']
    %12 = vsyncpa [#allocation3], 0
    // Predicated region
    $region2: #{fcn_forward.1} parent=1 // pred_check
      _
    $region3: #{fcn_forward.1} parent=1 // pred_check_branch
      %14 = sbr.rel (0) target = $region5
    $region4: #{fcn_forward.1} parent=1 // pred_region
      _
    $region5: #{fcn_forward.1} parent=1 // pred_fallthru
      _
    // Predicated region
    $region6: #{fcn_forward.1} parent=1 // pred_check
      _
    $region7: #{fcn_forward.1} parent=1 // pred_check_branch
      %16 = sbr.rel (0) target = $region9
    $region8: #{fcn_forward.1} parent=1 // pred_region
      _
    $region9: #{fcn_forward.1} parent=1 // pred_fallthru
      _
    // Predicated region
    $region10: #{fcn_forward.1} parent=1 // pred_check
      _
    $region11: #{fcn_forward.1} parent=1 // pred_check_branch
      %18 = sbr.rel (0) target = $region13
    $region12: #{fcn_forward.1} parent=1 // pred_region
      _
    $region13: #{fcn_forward.1} parent=1 // pred_fallthru
      _
    // Predicated region
    $region14: #{fcn_forward.1} parent=1 // pred_check
      _
    $region15: #{fcn_forward.1} parent=1 // pred_check_branch
      %20 = sbr.rel (0) target = $region17
    $region16: #{fcn_forward.1} parent=1 // pred_region
      _
    $region17: #{fcn_forward.1} parent=1 // pred_fallthru
      _
    // Predicated region
    $region18: #{fcn_forward.1} parent=1 // pred_check
      _
    $region19: #{fcn_forward.1} parent=1 // pred_check_branch
      %22 = sbr.rel (0) target = $region21
    $region20: #{fcn_forward.1} parent=1 // pred_region
      _
    $region21: #{fcn_forward.1} parent=1 // pred_fallthru
      _
    // Predicated region
    $region22: #{fcn_forward.1} parent=1 // pred_check
      _
    $region23: #{fcn_forward.1} parent=1 // pred_check_branch
      %24 = sbr.rel (0) target = $region25
    $region24: #{fcn_forward.1} parent=1 // pred_region
      _
    $region25: #{fcn_forward.1} parent=1 // pred_fallthru
      _
    // Predicated region
    $region26: #{fcn_forward.1} parent=1 // pred_check
      _
    $region27: #{fcn_forward.1} parent=1 // pred_check_branch
      %26 = sbr.rel (0) target = $region29
    $region28: #{fcn_forward.1} parent=1 // pred_region
      _
    $region29: #{fcn_forward.1} parent=1 // pred_fallthru
      _
    %v28 = vld [vmem:[%s0] sm:$0x3]
    %v29 = vpack.c.bf16 %v28, %v28
    %v30 = vld [vmem:[%s1] sm:$0xf]
    %v31 = vld [vmem:[%s1 + $0x4] sm:$0xf]
    %v32 = vld [vmem:[%s1 + $0x8] sm:$0xf]
    %v33 = vld [vmem:[%s1 + $0xc] sm:$0xf]
    %v34 = vld [vmem:[%s1 + $0x10] sm:$0xf]
    %v35 = vld [vmem:[%s1 + $0x14] sm:$0xf]
    %v36 = vld [vmem:[%s1 + $0x18] sm:$0xf]
    %v37 = vld [vmem:[%s1 + $0x1c] sm:$0xf]
    %v38 = vld [vmem:[%s2] sm:$0x1]
    %v40 = vperm.slane %v38, 0
    %v50 = vunpack.c.l.b16 %v30
    %v51 = vunpack.c.l.b16 %v31
    %v52 = vunpack.c.l.b16 %v32
    %v53 = vunpack.c.l.b16 %v33
    %v54 = vunpack.c.l.b16 %v34
    %v55 = vunpack.c.l.b16 %v35
    %v56 = vunpack.c.l.b16 %v36
    %v57 = vunpack.c.l.b16 %v37
    %v58 = vpack.c.b16 %v51, %v50
    %v59 = vpack.c.b16 %v53, %v52
    %v60 = vpack.c.b16 %v55, %v54
    %v61 = vpack.c.b16 %v57, %v56
    %vm66 = vcmask 523264
    %v68 = vsel %vm66, %v29, 0
    %70 = vmatpush.bf16.msra.mxu0 0
    %71 = vmatpush.bf16.msra.mxu0 0
    %72 = vmatpush.bf16.msra.mxu0 0
    %73 = vmatpush.bf16.msra.mxu0 0
    %74 = vmatpush.bf16.msra.mxu0 %v61
    %75 = vmatpush.bf16.msra.mxu0 %v60
    %76 = vmatpush.bf16.msra.mxu0 %v59
    %77 = vmatpush.bf16.msra.mxu0 %v58
    %78 = vmatmul.bf16.gmra.mxu0 %v68
    %v79 = vpop.f32.mrf.mxu0
    %v80 = vadd.f32 %v40, %v79
    %v81 = vpop.f32.mrf.mxu0
    %82 = vdwg.mxu0
    %v83 = vmax.f32 %v80, 0.0
    %v84 = vld [vmem:[%s3] sm:$0xf]
    %v85 = vld [vmem:[%s3 + $0x4] sm:$0xf]
    %v86 = vld [vmem:[%s3 + $0x8] sm:$0xf]
    %v87 = vld [vmem:[%s3 + $0xc] sm:$0xf]
    %v88 = vpack.c.bf16 %v83, %v83
    %v89 = vld [vmem:[%s4] sm:$0x1]
    %v91 = vperm.slane %v89, 0
    %v97 = vunpack.c.l.b16 %v84
    %v98 = vunpack.c.l.b16 %v85
    %v99 = vunpack.c.l.b16 %v86
    %v100 = vunpack.c.l.b16 %v87
    %v101 = vpack.c.b16 %v98, %v97
    %v102 = vpack.c.b16 %v100, %v99
    %vm105 = vcmask 261120
    %v107 = vsel %vm105, %v88, 0
    %109 = vmatpush.bf16.msra.mxu0 0
    %110 = vmatpush.bf16.msra.mxu0 0
    %111 = vmatpush.bf16.msra.mxu0 0
    %112 = vmatpush.bf16.msra.mxu0 0
    %113 = vmatpush.bf16.msra.mxu0 0
    %114 = vmatpush.bf16.msra.mxu0 0
    %115 = vmatpush.bf16.msra.mxu0 %v102
    %116 = vmatpush.bf16.msra.mxu0 %v101
    %117 = vmatmul.bf16.gmra.mxu0 %v107
    %v118 = vpop.f32.mrf.mxu0
    %v119 = vadd.f32 %v91, %v118
    %v120 = vpop.f32.mrf.mxu0
    %121 = vdwg.mxu0
    %v122 = vmax.f32 %v119, 0.0
    %s123 = scalar_lea.vmem %s3, 16
    %v124 = vld [vmem:[%s123] sm:$0xf]
    %v125 = vld [vmem:[%s123 + $0x4] sm:$0xf]
    %v126 = vld [vmem:[%s123 + $0x8] sm:$0xf]
    %v127 = vld [vmem:[%s123 + $0xc] sm:$0xf]
    %v128 = vpack.c.bf16 %v122, %v122
    %s129 = scalar_lea.vmem %s4, 1
    %v130 = vld [vmem:[%s129] sm:$0x1]
    %v132 = vperm.slane %v130, 0
    %v138 = vunpack.c.l.b16 %v124
    %v139 = vunpack.c.l.b16 %v125
    %v140 = vunpack.c.l.b16 %v126
    %v141 = vunpack.c.l.b16 %v127
    %v142 = vpack.c.b16 %v139, %v138
    %v143 = vpack.c.b16 %v141, %v140
    %v147 = vsel %vm105, %v128, 0
    %149 = vmatpush.bf16.msra.mxu0 0
    %150 = vmatpush.bf16.msra.mxu0 0
    %151 = vmatpush.bf16.msra.mxu0 0
    %152 = vmatpush.bf16.msra.mxu0 0
    %153 = vmatpush.bf16.msra.mxu0 0
    %154 = vmatpush.bf16.msra.mxu0 0
    %155 = vmatpush.bf16.msra.mxu0 %v143
    %156 = vmatpush.bf16.msra.mxu0 %v142
    %157 = vmatmul.bf16.gmra.mxu0 %v147
    %v158 = vpop.f32.mrf.mxu0
    %v159 = vadd.f32 %v132, %v158
    %v160 = vpop.f32.mrf.mxu0
    %161 = vdwg.mxu0
    %v162 = vmax.f32 %v159, 0.0
    %v163 = vpack.c.bf16 %v162, %v162
    %v164 = vld [vmem:[%s5] sm:$0xf]
    %v165 = vld [vmem:[%s5 + $0x4] sm:$0xf]
    %v166 = vld [vmem:[%s5 + $0x8] sm:$0xf]
    %v167 = vld [vmem:[%s5 + $0xc] sm:$0xf]
    %v168 = vld [vmem:[%s6] sm:$0x1]
    %v170 = vperm.slane %v168, 0
    %v176 = vunpack.c.l.b16 %v164
    %v177 = vunpack.c.l.b16 %v165
    %v178 = vunpack.c.l.b16 %v166
    %v179 = vunpack.c.l.b16 %v167
    %v180 = vpack.c.b16 %v177, %v176
    %v181 = vpack.c.b16 %v179, %v178
    %v185 = vsel %vm105, %v163, 0
    %187 = vmatpush.bf16.msra.mxu0 0
    %188 = vmatpush.bf16.msra.mxu0 0
    %189 = vmatpush.bf16.msra.mxu0 0
    %190 = vmatpush.bf16.msra.mxu0 0
    %191 = vmatpush.bf16.msra.mxu0 0
    %192 = vmatpush.bf16.msra.mxu0 0
    %193 = vmatpush.bf16.msra.mxu0 %v181
    %194 = vmatpush.bf16.msra.mxu0 %v180
    %195 = vmatmul.bf16.gmra.mxu0 %v185
    %v196 = vpop.f32.mrf.mxu0
    %v197 = vadd.f32 %v170, %v196
    %v198 = vpop.f32.mrf.mxu0
    %199 = vdwg.mxu0
    %vm200 = vcmask 58368
    %201 = vst.msk [vmem:[#allocation2] sm:$0x3] %vm200, %v197
    // Predicated region
    $region30: #{fcn_forward.1} parent=1 // pred_check
      _
    $region31: #{fcn_forward.1} parent=1 // pred_check_branch
      %203 = sbr.rel (0) target = $region33
    $region32: #{fcn_forward.1} parent=1 // pred_region
      %205 = vsyncadd [#allocation3], 0
      %s207 = sshll.u32 [#allocation2], 4
      %s208 = int_to_ptr.vmem [resolvable:$true] %s207
      %s209 = sshll.u32 %s7, 4
      %s210 = int_to_ptr.hbm [resolvable:$true] %s209
      %212 = dma.vmem_to_hbm [thread:$0]  %s208, 32, %s210, [#allocation3]
    $region33: #{fcn_forward.1} parent=1 // pred_fallthru
      _
    // Predicated region
    $region34: #{fcn_forward.1} parent=1 // pred_check
      _
    $region35: #{fcn_forward.1} parent=1 // pred_check_branch
      %214 = sbr.rel (0) target = $region37
    $region36: #{fcn_forward.1} parent=1 // pred_region
      %216 = dma.done [#allocation3], 32
    $region37: #{fcn_forward.1} parent=1 // pred_fallthru
      _
    %217 = vsyncpa [#allocation3], 1

// kernel: fcn_forward.1
$region0: #{fcn_forward.1}
  #allocation0 [shape = 'u32[]', space=smem, size = 0x4, offset = 0x4, fixed_abs, tag = 'smem constant byte address 0x4 - core index']
  #allocation1 [shape = 'u32[72,128]{1,0:T(1,128)}', space=vmem, size = 0x9000, scoped, tag = 'internal scratch']
  %s0 = inlined_call_operand.vmem [shape: f32[2,64], index: 0, kind: input, shape index: {}]
  %s1 = inlined_call_operand.vmem [shape: bf16[64,32], index: 1, kind: input, shape index: {}]
  %s2 = inlined_call_operand.vmem [shape: f32[1,32], index: 2, kind: input, shape index: {}]
  %s3 = inlined_call_operand.vmem [shape: bf16[2,32,32], index: 3, kind: input, shape index: {}]
  %s4 = inlined_call_operand.vmem [shape: f32[2,1,32], index: 4, kind: input, shape index: {}]
  %s5 = inlined_call_operand.vmem [shape: bf16[32,8], index: 5, kind: input, shape index: {}]
  %s6 = inlined_call_operand.vmem [shape: f32[1,8], index: 6, kind: input, shape index: {}]
  %s7 = inlined_call_operand.hbm [shape: f32[2,8], index: 7, kind: output, shape index: {}]
  %s8 = sld [smem:[#allocation0]]
  $region38: #{fcn_forward.1} parent=0
    _
  %s10 = ssub.s32 1, %s8
  %s11 = scalar_select 0, %s10, %s8
  $region1: #{fcn_forward.1} parent=0
    #allocation2 [shape = 'u8[1024]{0}', space=vmem, size = 0x400, scoped, tag = 'output window, operand 0, single buffered']
    #allocation3 [shape = 's32[1]{0}', space=sflag, size = 0x4, scoped, tag = 'scoped memory for fcn_forward.1']
    %12 = vsyncpa [#allocation3], 0
    // Predicated region
    $region2: #{fcn_forward.1} parent=1 // pred_check
      _
    $region3: #{fcn_forward.1} parent=1 // pred_check_branch
      %14 = sbr.rel (0) target = $region5
    $region4: #{fcn_forward.1} parent=1 // pred_region
      _
    $region5: #{fcn_forward.1} parent=1 // pred_fallthru
      _
    // Predicated region
    $region6: #{fcn_forward.1} parent=1 // pred_check
      _
    $region7: #{fcn_forward.1} parent=1 // pred_check_branch
      %16 = sbr.rel (0) target = $region9
    $region8: #{fcn_forward.1} parent=1 // pred_region
      _
    $region9: #{fcn_forward.1} parent=1 // pred_fallthru
      _
    // Predicated region
    $region10: #{fcn_forward.1} parent=1 // pred_check
      _
    $region11: #{fcn_forward.1} parent=1 // pred_check_branch
      %18 = sbr.rel (0) target = $region13
    $region12: #{fcn_forward.1} parent=1 // pred_region
      _
    $region13: #{fcn_forward.1} parent=1 // pred_fallthru
      _
    // Predicated region
    $region14: #{fcn_forward.1} parent=1 // pred_check
      _
    $region15: #{fcn_forward.1} parent=1 // pred_check_branch
      %20 = sbr.rel (0) target = $region17
    $region16: #{fcn_forward.1} parent=1 // pred_region
      _
    $region17: #{fcn_forward.1} parent=1 // pred_fallthru
      _
    // Predicated region
    $region18: #{fcn_forward.1} parent=1 // pred_check
      _
    $region19: #{fcn_forward.1} parent=1 // pred_check_branch
      %22 = sbr.rel (0) target = $region21
    $region20: #{fcn_forward.1} parent=1 // pred_region
      _
    $region21: #{fcn_forward.1} parent=1 // pred_fallthru
      _
    // Predicated region
    $region22: #{fcn_forward.1} parent=1 // pred_check
      _
    $region23: #{fcn_forward.1} parent=1 // pred_check_branch
      %24 = sbr.rel (0) target = $region25
    $region24: #{fcn_forward.1} parent=1 // pred_region
      _
    $region25: #{fcn_forward.1} parent=1 // pred_fallthru
      _
    // Predicated region
    $region26: #{fcn_forward.1} parent=1 // pred_check
      _
    $region27: #{fcn_forward.1} parent=1 // pred_check_branch
      %26 = sbr.rel (0) target = $region29
    $region28: #{fcn_forward.1} parent=1 // pred_region
      _
    $region29: #{fcn_forward.1} parent=1 // pred_fallthru
      _
    %v28 = vld [vmem:[%s0] sm:$0x3]
    %v29 = vpack.c.bf16 %v28, %v28
    %v30 = vld [vmem:[%s1] sm:$0xf]
    %v31 = vld [vmem:[%s1 + $0x4] sm:$0xf]
    %v32 = vld [vmem:[%s1 + $0x8] sm:$0xf]
    %v33 = vld [vmem:[%s1 + $0xc] sm:$0xf]
    %v34 = vld [vmem:[%s1 + $0x10] sm:$0xf]
    %v35 = vld [vmem:[%s1 + $0x14] sm:$0xf]
    %v36 = vld [vmem:[%s1 + $0x18] sm:$0xf]
    %v37 = vld [vmem:[%s1 + $0x1c] sm:$0xf]
    %v38 = vld [vmem:[%s2] sm:$0x1]
    %v40 = vperm.slane %v38, 0
    %v50 = vunpack.c.l.b16 %v30
    %v51 = vunpack.c.l.b16 %v31
    %v52 = vunpack.c.l.b16 %v32
    %v53 = vunpack.c.l.b16 %v33
    %v54 = vunpack.c.l.b16 %v34
    %v55 = vunpack.c.l.b16 %v35
    %v56 = vunpack.c.l.b16 %v36
    %v57 = vunpack.c.l.b16 %v37
    %v58 = vpack.c.b16 %v51, %v50
    %v59 = vpack.c.b16 %v53, %v52
    %v60 = vpack.c.b16 %v55, %v54
    %v61 = vpack.c.b16 %v57, %v56
    %vm66 = vcmask 523264
    %v68 = vsel %vm66, %v29, 0
    %70 = vmatpush.bf16.msra.mxu0 0
    %71 = vmatpush.bf16.msra.mxu0 0
    %72 = vmatpush.bf16.msra.mxu0 0
    %73 = vmatpush.bf16.msra.mxu0 0
    %74 = vmatpush.bf16.msra.mxu0 %v61
    %75 = vmatpush.bf16.msra.mxu0 %v60
    %76 = vmatpush.bf16.msra.mxu0 %v59
    %77 = vmatpush.bf16.msra.mxu0 %v58
    %78 = vmatmul.bf16.gmra.mxu0 %v68
    %v79 = vpop.f32.mrf.mxu0
    %v80 = vadd.f32 %v40, %v79
    %v81 = vpop.f32.mrf.mxu0
    %82 = vdwg.mxu0
    %v83 = vmax.f32 %v80, 0.0
    %v84 = vld [vmem:[%s3] sm:$0xf]
    %v85 = vld [vmem:[%s3 + $0x4] sm:$0xf]
    %v86 = vld [vmem:[%s3 + $0x8] sm:$0xf]
    %v87 = vld [vmem:[%s3 + $0xc] sm:$0xf]
    %v88 = vpack.c.bf16 %v83, %v83
    %v89 = vld [vmem:[%s4] sm:$0x1]
    %v91 = vperm.slane %v89, 0
    %v97 = vunpack.c.l.b16 %v84
    %v98 = vunpack.c.l.b16 %v85
    %v99 = vunpack.c.l.b16 %v86
    %v100 = vunpack.c.l.b16 %v87
    %v101 = vpack.c.b16 %v98, %v97
    %v102 = vpack.c.b16 %v100, %v99
    %vm105 = vcmask 261120
    %v107 = vsel %vm105, %v88, 0
    %109 = vmatpush.bf16.msra.mxu0 0
    %110 = vmatpush.bf16.msra.mxu0 0
    %111 = vmatpush.bf16.msra.mxu0 0
    %112 = vmatpush.bf16.msra.mxu0 0
    %113 = vmatpush.bf16.msra.mxu0 0
    %114 = vmatpush.bf16.msra.mxu0 0
    %115 = vmatpush.bf16.msra.mxu0 %v102
    %116 = vmatpush.bf16.msra.mxu0 %v101
    %117 = vmatmul.bf16.gmra.mxu0 %v107
    %v118 = vpop.f32.mrf.mxu0
    %v119 = vadd.f32 %v91, %v118
    %v120 = vpop.f32.mrf.mxu0
    %121 = vdwg.mxu0
    %v122 = vmax.f32 %v119, 0.0
    %s123 = scalar_lea.vmem %s3, 16
    %v124 = vld [vmem:[%s123] sm:$0xf]
    %v125 = vld [vmem:[%s123 + $0x4] sm:$0xf]
    %v126 = vld [vmem:[%s123 + $0x8] sm:$0xf]
    %v127 = vld [vmem:[%s123 + $0xc] sm:$0xf]
    %v128 = vpack.c.bf16 %v122, %v122
    %s129 = scalar_lea.vmem %s4, 1
    %v130 = vld [vmem:[%s129] sm:$0x1]
    %v132 = vperm.slane %v130, 0
    %v138 = vunpack.c.l.b16 %v124
    %v139 = vunpack.c.l.b16 %v125
    %v140 = vunpack.c.l.b16 %v126
    %v141 = vunpack.c.l.b16 %v127
    %v142 = vpack.c.b16 %v139, %v138
    %v143 = vpack.c.b16 %v141, %v140
    %v147 = vsel %vm105, %v128, 0
    %149 = vmatpush.bf16.msra.mxu0 0
    %150 = vmatpush.bf16.msra.mxu0 0
    %151 = vmatpush.bf16.msra.mxu0 0
    %152 = vmatpush.bf16.msra.mxu0 0
    %153 = vmatpush.bf16.msra.mxu0 0
    %154 = vmatpush.bf16.msra.mxu0 0
    %155 = vmatpush.bf16.msra.mxu0 %v143
    %156 = vmatpush.bf16.msra.mxu0 %v142
    %157 = vmatmul.bf16.gmra.mxu0 %v147
    %v158 = vpop.f32.mrf.mxu0
    %v159 = vadd.f32 %v132, %v158
    %v160 = vpop.f32.mrf.mxu0
    %161 = vdwg.mxu0
    %v162 = vmax.f32 %v159, 0.0
    %v163 = vpack.c.bf16 %v162, %v162
    %v164 = vld [vmem:[%s5] sm:$0xf]
    %v165 = vld [vmem:[%s5 + $0x4] sm:$0xf]
    %v166 = vld [vmem:[%s5 + $0x8] sm:$0xf]
    %v167 = vld [vmem:[%s5 + $0xc] sm:$0xf]
    %v168 = vld [vmem:[%s6] sm:$0x1]
    %v170 = vperm.slane %v168, 0
    %v176 = vunpack.c.l.b16 %v164
    %v177 = vunpack.c.l.b16 %v165
    %v178 = vunpack.c.l.b16 %v166
    %v179 = vunpack.c.l.b16 %v167
    %v180 = vpack.c.b16 %v177, %v176
    %v181 = vpack.c.b16 %v179, %v178
    %v185 = vsel %vm105, %v163, 0
    %187 = vmatpush.bf16.msra.mxu0 0
    %188 = vmatpush.bf16.msra.mxu0 0
    %189 = vmatpush.bf16.msra.mxu0 0
    %190 = vmatpush.bf16.msra.mxu0 0
    %191 = vmatpush.bf16.msra.mxu0 0
    %192 = vmatpush.bf16.msra.mxu0 0
    %193 = vmatpush.bf16.msra.mxu0 %v181
    %194 = vmatpush.bf16.msra.mxu0 %v180
    %195 = vmatmul.bf16.gmra.mxu0 %v185
    %v196 = vpop.f32.mrf.mxu0
    %v197 = vadd.f32 %v170, %v196
    %v198 = vpop.f32.mrf.mxu0
    %199 = vdwg.mxu0
    %vm200 = vcmask 58368
    %201 = vst.msk [vmem:[#allocation2] sm:$0x3] %vm200, %v197
    // Predicated region
    $region30: #{fcn_forward.1} parent=1 // pred_check
      _
    $region31: #{fcn_forward.1} parent=1 // pred_check_branch
      %203 = sbr.rel (0) target = $region33
    $region32: #{fcn_forward.1} parent=1 // pred_region
      %205 = vsyncadd [#allocation3], 0
      %s207 = sshll.u32 [#allocation2], 4
      %s208 = int_to_ptr.vmem [resolvable:$true] %s207
      %s209 = sshll.u32 %s7, 4
      %s210 = int_to_ptr.hbm [resolvable:$true] %s209
      %212 = dma.vmem_to_hbm [thread:$0]  %s208, 32, %s210, [#allocation3]
    $region33: #{fcn_forward.1} parent=1 // pred_fallthru
      _
    // Predicated region
    $region34: #{fcn_forward.1} parent=1 // pred_check
      _
    $region35: #{fcn_forward.1} parent=1 // pred_check_branch
      %214 = sbr.rel (0) target = $region37
    $region36: #{fcn_forward.1} parent=1 // pred_region
      %216 = dma.done [#allocation3], 32
    $region37: #{fcn_forward.1} parent=1 // pred_fallthru
      _
    %217 = vsyncpa [#allocation3], 1

</llo_original>
